<compile_context>
chip_gen: v6e
topology: v6e:2x2x1
jax: 0.10.0
libtpu: 0.0.40
codegen_flags: <defaults>
</compile_context>

<pallas_src>
import math

import jax
import jax.numpy as jnp
from jax.experimental import pallas as pl
from jax.experimental.pallas import tpu as pltpu

# action_space is None in this setup -> scale=1.0, bias=0.0
ACTION_SCALE = 1.0
ACTION_BIAS = 0.0
LOG_STD_MIN = -20.0
LOG_STD_MAX = 2.0

_HALF_LOG_2PI = 0.5 * math.log(2.0 * math.pi)
_LOG2 = math.log(2.0)


def _round_up(x, m):
    return ((x + m - 1) // m) * m


def gaussian_policy_kernel(state_ref, eps_ref,
                           w1_ref, b1_ref, w2_ref, b2_ref,
                           wh_ref, bh_ref,
                           out_ref):
    """One batch tile: state (TB,S), eps (TB,A) -> out slab (TB, OUT_W)."""
    A = eps_ref.shape[-1]
    TB, OUT_W = out_ref.shape
    cdt = w1_ref.dtype          # bf16 compute dtype for the MXU
    f32 = jnp.float32

    # --- mlp: Linear -> ReLU -> Linear -> ReLU (bf16 MXU, f32 accum) ---
    x = state_ref[...].astype(cdt)
    h = jnp.dot(x, w1_ref[...], preferred_element_type=f32) + b1_ref[...]
    h = jnp.maximum(h, 0.0)
    h = jnp.dot(h.astype(cdt), w2_ref[...], preferred_element_type=f32) + b2_ref[...]
    h = jnp.maximum(h, 0.0)

    # --- fused heads: one (H, 2A) matmul, split mu / log_std by lane slice ---
    heads = jnp.dot(h.astype(cdt), wh_ref[...], preferred_element_type=f32) + bh_ref[...]
    mu = heads[:, :A]
    log_std = jnp.clip(heads[:, A:2 * A], LOG_STD_MIN, LOG_STD_MAX)
    std = jnp.exp(log_std)

    # --- reparameterized sample + tanh squash ---
    eps = eps_ref[...]
    x_t = mu + std * eps
    y_t = jnp.tanh(x_t)
    action = y_t * ACTION_SCALE + ACTION_BIAS

    # --- Normal(mu, std).log_prob(x_t) with tanh correction ---
    #   log N(x_t; mu, std) = -0.5*eps^2 - log_std - 0.5*log(2*pi)
    log_prob = -0.5 * eps * eps - log_std - _HALF_LOG_2PI
    #   log(scale*(1 - tanh(x)^2)) = log(scale) + 2*(log2 - x - softplus(-2x))
    z = -2.0 * x_t
    softplus = jnp.maximum(z, 0.0) + jnp.log(1.0 + jnp.exp(-jnp.abs(z)))
    log_prob = log_prob - (math.log(ACTION_SCALE) + 2.0 * (_LOG2 - x_t - softplus))
    logp = jnp.sum(log_prob, axis=1, keepdims=True)  # (TB, 1), XLU reduce

    # --- lane-dense output slab: [action | log_prob | zero pad] ---
    # Whole-tile zero store keeps the HBM writeback a dense 128-lane block;
    # the two narrow VMEM sub-writes below are negligible.
    out_ref[...] = jnp.zeros((TB, OUT_W), f32)
    out_ref[:, 0:A] = action.astype(f32)
    out_ref[:, A:A + 1] = logp.astype(f32)


def gaussian_policy_forward(state, eps, params):
    """Batched SAC policy forward via a batch-tiled Pallas kernel.

    Returns (action (B, A), log_prob (B, 1)).
    """
    B, S = state.shape
    A = eps.shape[1]
    w1, b1, w2, b2, wh, bh = params
    H = w1.shape[1]

    # Batch tile: multiple of 8 sublanes (f32); big (512) when the batch allows
    # it so per-step overhead (~0.35 us) amortizes and DMA pipelining pays off.
    TB = min(512, _round_up(max(B, 1), 8))
    B_pad = _round_up(B, TB)
    OUT_W = max(128, _round_up(A + 1, 128))   # lane-dense output width

    if B_pad != B:
        state = jnp.pad(state, ((0, B_pad - B), (0, 0)))
        eps = jnp.pad(eps, ((0, B_pad - B), (0, 0)))

    grid = (B_pad // TB,)

    def batch_spec(d):
        return pl.BlockSpec((TB, d), lambda i: (i, 0))

    def resident(arr):                          # weights: same block every step
        return pl.BlockSpec(arr.shape, lambda i: (0, 0))

    flops = 2 * B_pad * (S * H + H * H + H * 2 * A)
    transcendentals = 3 * B_pad * A             # exp(log_std), tanh, exp(softplus)
    bytes_accessed = int(
        state.size * 4 + eps.size * 4 + B_pad * OUT_W * 4
        + sum(int(p.size) * p.dtype.itemsize for p in params))

    out = pl.pallas_call(
        gaussian_policy_kernel,
        out_shape=jax.ShapeDtypeStruct((B_pad, OUT_W), jnp.float32),
        grid_spec=pltpu.PrefetchScalarGridSpec(
            num_scalar_prefetch=0,
            grid=grid,
            in_specs=[batch_spec(S), batch_spec(A),
                      resident(w1), resident(b1),
                      resident(w2), resident(b2),
                      resident(wh), resident(bh)],
            out_specs=pl.BlockSpec((TB, OUT_W), lambda i: (i, 0)),
        ),
        compiler_params=pltpu.CompilerParams(
            dimension_semantics=("parallel",),        # megacore on v7x
            vmem_limit_bytes=32 * 1024 * 1024),       # safe on v5e/v6e/v7x
        cost_estimate=pl.CostEstimate(
            flops=flops,
            transcendentals=transcendentals,
            bytes_accessed=bytes_accessed),
    )(state, eps, w1, b1, w2, b2, wh, bh)

    action = out[:B, :A]
    log_prob = out[:B, A:A + 1]
    return action, log_prob


def init_params(key, state_dim, hidden, action_dim, param_dtype=jnp.bfloat16):
    """PyTorch-style uniform(-1/sqrt(fan_in), 1/sqrt(fan_in)) init.
    Weights stored (in, out) in bf16 (MXU fast path); biases stay f32.
    The mu / log_std heads are fused into a single (hidden, 2*action_dim) weight."""
    ks = jax.random.split(key, 8)

    def lin(kw, kb, fan_in, fan_out):
        bound = 1.0 / math.sqrt(fan_in)
        w = jax.random.uniform(kw, (fan_in, fan_out), jnp.float32, -bound, bound)
        b = jax.random.uniform(kb, (1, fan_out), jnp.float32, -bound, bound)
        return w.astype(param_dtype), b

    w1, b1 = lin(ks[0], ks[1], state_dim, hidden)
    w2, b2 = lin(ks[2], ks[3], hidden, hidden)
    wmu, bmu = lin(ks[4], ks[5], hidden, action_dim)
    wls, bls = lin(ks[6], ks[7], hidden, action_dim)
    wh = jnp.concatenate([wmu, wls], axis=1)     # (H, 2A): [mu | log_std]
    bh = jnp.concatenate([bmu, bls], axis=1)     # (1, 2A)
    return (w1, b1, w2, b2, wh, bh)


def reference_forward(state, eps, params):
    """Pure-JAX reference (identical bf16 cast points -> tight tolerances)."""
    w1, b1, w2, b2, wh, bh = params
    cdt = w1.dtype
    f32 = jnp.float32
    A = eps.shape[1]

    h = jnp.maximum(jnp.dot(state.astype(cdt), w1, preferred_element_type=f32) + b1, 0.0)
    h = jnp.maximum(jnp.dot(h.astype(cdt), w2, preferred_element_type=f32) + b2, 0.0)
    heads = jnp.dot(h.astype(cdt), wh, preferred_element_type=f32) + bh
    mu = heads[:, :A]
    log_std = jnp.clip(heads[:, A:2 * A], LOG_STD_MIN, LOG_STD_MAX)
    std = jnp.exp(log_std)
    x_t = mu + std * eps
    y_t = jnp.tanh(x_t)
    action = y_t * ACTION_SCALE + ACTION_BIAS
    log_prob = -0.5 * eps * eps - log_std - _HALF_LOG_2PI
    z = -2.0 * x_t
    softplus = jnp.maximum(z, 0.0) + jnp.log(1.0 + jnp.exp(-jnp.abs(z)))
    log_prob = log_prob - (math.log(ACTION_SCALE) + 2.0 * (_LOG2 - x_t - softplus))
    return action, jnp.sum(log_prob, axis=1, keepdims=True)


if __name__ == "__main__":
    state_dim, action_dim, hidden = 8, 4, 32
    batch = 2

    key = jax.random.PRNGKey(0)
    k_state, k_eps, k_params = jax.random.split(key, 3)

    state = jax.random.normal(k_state, (batch, state_dim), dtype=jnp.float32)
    eps = jax.random.normal(k_eps, (batch, action_dim), dtype=jnp.float32)
    params = init_params(k_params, state_dim, hidden, action_dim)

    action, log_prob = gaussian_policy_forward(state, eps, params)
    action = jax.block_until_ready(action)
    log_prob = jax.block_until_ready(log_prob)

    ref_action, ref_log_prob = reference_forward(state, eps, params)
    assert action.shape == (batch, action_dim)
    assert log_prob.shape == (batch, 1)
    # bf16 weights -> slightly looser tolerances than pure f32.
    assert jnp.allclose(action, ref_action, atol=1e-3, rtol=1e-3)
    assert jnp.allclose(log_prob, ref_log_prob, atol=5e-3, rtol=5e-3)

    print("KERNEL_OK")
</pallas_src>

<mosaic_0001>
module attributes {stable_mosaic.version = 11 : i64} {
  func.func @gaussian_policy_kernel(%arg0: i32, %arg1: memref<8x8xf32, #tpu.memory_space<vmem>>, %arg2: memref<8x4xf32, #tpu.memory_space<vmem>>, %arg3: memref<8x32xbf16, #tpu.memory_space<vmem>>, %arg4: memref<1x32xf32, #tpu.memory_space<vmem>>, %arg5: memref<32x32xbf16, #tpu.memory_space<vmem>>, %arg6: memref<1x32xf32, #tpu.memory_space<vmem>>, %arg7: memref<32x8xbf16, #tpu.memory_space<vmem>>, %arg8: memref<1x8xf32, #tpu.memory_space<vmem>>, %arg9: memref<8x128xf32, #tpu.memory_space<vmem>>) attributes {dimension_semantics = [#tpu.dimension_semantics<parallel>], iteration_bounds = array<i64: 1>, scalar_prefetch = 0 : i64, scratch_operands = 0 : i64, tpu.core_type = #tpu.core_type<tc>, window_params = [{transform_indices = @transform_0, window_bounds = array<i64: 8, 8>}, {transform_indices = @transform_1, window_bounds = array<i64: 8, 4>}, {pipeline_mode = #tpu.pipeline_mode<synchronous>, transform_indices = @transform_2, window_bounds = array<i64: 8, 32>}, {pipeline_mode = #tpu.pipeline_mode<synchronous>, transform_indices = @transform_3, window_bounds = array<i64: 1, 32>}, {pipeline_mode = #tpu.pipeline_mode<synchronous>, transform_indices = @transform_4, window_bounds = array<i64: 32, 32>}, {pipeline_mode = #tpu.pipeline_mode<synchronous>, transform_indices = @transform_5, window_bounds = array<i64: 1, 32>}, {pipeline_mode = #tpu.pipeline_mode<synchronous>, transform_indices = @transform_6, window_bounds = array<i64: 32, 8>}, {pipeline_mode = #tpu.pipeline_mode<synchronous>, transform_indices = @transform_7, window_bounds = array<i64: 1, 8>}, {transform_indices = @transform_8, window_bounds = array<i64: 8, 128>}]} {
    %c0 = arith.constant 0 : index
    %c0_0 = arith.constant 0 : index
    %0 = vector.load %arg1[%c0, %c0_0] : memref<8x8xf32, #tpu.memory_space<vmem>>, vector<8x8xf32>
    %1 = arith.truncf %0 : vector<8x8xf32> to vector<8x8xbf16>
    %c0_1 = arith.constant 0 : index
    %c0_2 = arith.constant 0 : index
    %2 = vector.load %arg3[%c0_1, %c0_2] : memref<8x32xbf16, #tpu.memory_space<vmem>>, vector<8x32xbf16>
    %cst = arith.constant dense<0.000000e+00> : vector<8x32xf32>
    %3 = tpu.matmul %1, %2, %cst {dimension_numbers = #tpu.dot_dimension_numbers<[1], [0], [0], [1], [0, 0, 1, 1], [], []>} : vector<8x8xbf16>, vector<8x32xbf16>, vector<8x32xf32> -> vector<8x32xf32>
    %c0_3 = arith.constant 0 : index
    %c0_4 = arith.constant 0 : index
    %4 = vector.load %arg4[%c0_3, %c0_4] : memref<1x32xf32, #tpu.memory_space<vmem>>, vector<1x32xf32>
    %5 = vector.broadcast %4 : vector<1x32xf32> to vector<8x32xf32>
    %6 = arith.addf %3, %5 : vector<8x32xf32>
    %cst_5 = arith.constant 0.000000e+00 : f32
    %7 = vector.broadcast %cst_5 : f32 to vector<8x32xf32>
    %8 = arith.maximumf %6, %7 : vector<8x32xf32>
    %9 = arith.truncf %8 : vector<8x32xf32> to vector<8x32xbf16>
    %c0_6 = arith.constant 0 : index
    %c0_7 = arith.constant 0 : index
    %10 = vector.load %arg5[%c0_6, %c0_7] : memref<32x32xbf16, #tpu.memory_space<vmem>>, vector<32x32xbf16>
    %cst_8 = arith.constant dense<0.000000e+00> : vector<8x32xf32>
    %11 = tpu.matmul %9, %10, %cst_8 {dimension_numbers = #tpu.dot_dimension_numbers<[1], [0], [0], [1], [0, 0, 1, 1], [], []>} : vector<8x32xbf16>, vector<32x32xbf16>, vector<8x32xf32> -> vector<8x32xf32>
    %c0_9 = arith.constant 0 : index
    %c0_10 = arith.constant 0 : index
    %12 = vector.load %arg6[%c0_9, %c0_10] : memref<1x32xf32, #tpu.memory_space<vmem>>, vector<1x32xf32>
    %13 = vector.broadcast %12 : vector<1x32xf32> to vector<8x32xf32>
    %14 = arith.addf %11, %13 : vector<8x32xf32>
    %cst_11 = arith.constant 0.000000e+00 : f32
    %15 = vector.broadcast %cst_11 : f32 to vector<8x32xf32>
    %16 = arith.maximumf %14, %15 : vector<8x32xf32>
    %17 = arith.truncf %16 : vector<8x32xf32> to vector<8x32xbf16>
    %c0_12 = arith.constant 0 : index
    %c0_13 = arith.constant 0 : index
    %18 = vector.load %arg7[%c0_12, %c0_13] : memref<32x8xbf16, #tpu.memory_space<vmem>>, vector<32x8xbf16>
    %cst_14 = arith.constant dense<0.000000e+00> : vector<8x8xf32>
    %19 = tpu.matmul %17, %18, %cst_14 {dimension_numbers = #tpu.dot_dimension_numbers<[1], [0], [0], [1], [0, 0, 1, 1], [], []>} : vector<8x32xbf16>, vector<32x8xbf16>, vector<8x8xf32> -> vector<8x8xf32>
    %c0_15 = arith.constant 0 : index
    %c0_16 = arith.constant 0 : index
    %20 = vector.load %arg8[%c0_15, %c0_16] : memref<1x8xf32, #tpu.memory_space<vmem>>, vector<1x8xf32>
    %21 = vector.broadcast %20 : vector<1x8xf32> to vector<8x8xf32>
    %22 = arith.addf %19, %21 : vector<8x8xf32>
    %23 = vector.extract_strided_slice %22 {offsets = [0, 0], sizes = [8, 4], strides = [1, 1]} : vector<8x8xf32> to vector<8x4xf32>
    %24 = vector.extract_strided_slice %22 {offsets = [0, 4], sizes = [8, 4], strides = [1, 1]} : vector<8x8xf32> to vector<8x4xf32>
    %cst_17 = arith.constant -2.000000e+01 : f32
    %cst_18 = arith.constant 2.000000e+00 : f32
    %25 = vector.broadcast %cst_17 : f32 to vector<8x4xf32>
    %26 = arith.maximumf %25, %24 : vector<8x4xf32>
    %27 = vector.broadcast %cst_18 : f32 to vector<8x4xf32>
    %28 = arith.minimumf %27, %26 : vector<8x4xf32>
    %29 = math.exp %28 : vector<8x4xf32>
    %c0_19 = arith.constant 0 : index
    %c0_20 = arith.constant 0 : index
    %30 = vector.load %arg2[%c0_19, %c0_20] : memref<8x4xf32, #tpu.memory_space<vmem>>, vector<8x4xf32>
    %31 = arith.mulf %29, %30 : vector<8x4xf32>
    %32 = arith.addf %23, %31 : vector<8x4xf32>
    %33 = math.tanh %32 : vector<8x4xf32>
    %cst_21 = arith.constant 1.000000e+00 : f32
    %34 = vector.broadcast %cst_21 : f32 to vector<8x4xf32>
    %35 = arith.mulf %33, %34 : vector<8x4xf32>
    %cst_22 = arith.constant 0.000000e+00 : f32
    %36 = vector.broadcast %cst_22 : f32 to vector<8x4xf32>
    %37 = arith.addf %35, %36 : vector<8x4xf32>
    %cst_23 = arith.constant -5.000000e-01 : f32
    %38 = vector.broadcast %cst_23 : f32 to vector<8x4xf32>
    %39 = arith.mulf %38, %30 : vector<8x4xf32>
    %40 = arith.mulf %39, %30 : vector<8x4xf32>
    %41 = arith.subf %40, %28 : vector<8x4xf32>
    %cst_24 = arith.constant 0.918938517 : f32
    %42 = vector.broadcast %cst_24 : f32 to vector<8x4xf32>
    %43 = arith.subf %41, %42 : vector<8x4xf32>
    %cst_25 = arith.constant -2.000000e+00 : f32
    %44 = vector.broadcast %cst_25 : f32 to vector<8x4xf32>
    %45 = arith.mulf %44, %32 : vector<8x4xf32>
    %cst_26 = arith.constant 0.000000e+00 : f32
    %46 = vector.broadcast %cst_26 : f32 to vector<8x4xf32>
    %47 = arith.maximumf %45, %46 : vector<8x4xf32>
    %48 = math.absf %45 : vector<8x4xf32>
    %cst_27 = arith.constant 0.000000e+00 : f32
    %49 = vector.broadcast %cst_27 : f32 to vector<8x4xf32>
    %50 = arith.subf %49, %48 : vector<8x4xf32>
    %51 = math.exp %50 : vector<8x4xf32>
    %cst_28 = arith.constant 1.000000e+00 : f32
    %52 = vector.broadcast %cst_28 : f32 to vector<8x4xf32>
    %53 = arith.addf %52, %51 : vector<8x4xf32>
    %54 = math.log %53 : vector<8x4xf32>
    %55 = arith.addf %47, %54 : vector<8x4xf32>
    %cst_29 = arith.constant 0.693147182 : f32
    %56 = vector.broadcast %cst_29 : f32 to vector<8x4xf32>
    %57 = arith.subf %56, %32 : vector<8x4xf32>
    %58 = arith.subf %57, %55 : vector<8x4xf32>
    %cst_30 = arith.constant 2.000000e+00 : f32
    %59 = vector.broadcast %cst_30 : f32 to vector<8x4xf32>
    %60 = arith.mulf %59, %58 : vector<8x4xf32>
    %cst_31 = arith.constant 0.000000e+00 : f32
    %61 = vector.broadcast %cst_31 : f32 to vector<8x4xf32>
    %62 = arith.addf %61, %60 : vector<8x4xf32>
    %63 = arith.subf %43, %62 : vector<8x4xf32>
    %cst_32 = arith.constant dense<0.000000e+00> : vector<8xf32>
    %64 = vector.multi_reduction <add>, %63, %cst_32 [1] : vector<8x4xf32> to vector<8xf32>
    %65 = vector.shape_cast %64 : vector<8xf32> to vector<8x1xf32>
    %cst_33 = arith.constant 0.000000e+00 : f32
    %66 = vector.broadcast %cst_33 : f32 to vector<8x128xf32>
    %c0_34 = arith.constant 0 : index
    %c0_35 = arith.constant 0 : index
    %67 = vector.load %arg9[%c0_34, %c0_35] : memref<8x128xf32, #tpu.memory_space<vmem>>, vector<8x128xf32>
    tpu.vector_store %arg9[%c0_34, %c0_35], %66 {strides = array<i32>} : memref<8x128xf32, #tpu.memory_space<vmem>>, vector<8x128xf32>,
    %c0_36 = arith.constant 0 : index
    %c0_37 = arith.constant 0 : index
    %68 = vector.load %arg9[%c0_36, %c0_37] : memref<8x128xf32, #tpu.memory_space<vmem>>, vector<8x4xf32>
    tpu.vector_store %arg9[%c0_36, %c0_37], %37 {strides = array<i32>} : memref<8x128xf32, #tpu.memory_space<vmem>>, vector<8x4xf32>,
    %c0_38 = arith.constant 0 : index
    %c4 = arith.constant 4 : index
    %69 = vector.load %arg9[%c0_38, %c4] : memref<8x128xf32, #tpu.memory_space<vmem>>, vector<8x1xf32>
    tpu.vector_store %arg9[%c0_38, %c4], %65 {strides = array<i32>} : memref<8x128xf32, #tpu.memory_space<vmem>>, vector<8x1xf32>,
    return
  }
  func.func @transform_0(%arg0: i32) -> (i32, i32) {
    %c0_i32 = arith.constant 0 : i32
    %c0_i32_0 = arith.constant 0 : i32
    return %arg0, %c0_i32 : i32, i32
  }
  func.func @transform_1(%arg0: i32) -> (i32, i32) {
    %c0_i32 = arith.constant 0 : i32
    %c0_i32_0 = arith.constant 0 : i32
    return %arg0, %c0_i32 : i32, i32
  }
  func.func @transform_2(%arg0: i32) -> (i32, i32) {
    %c0_i32 = arith.constant 0 : i32
    %c0_i32_0 = arith.constant 0 : i32
    %c0_i32_1 = arith.constant 0 : i32
    return %c0_i32, %c0_i32_0 : i32, i32
  }
  func.func @transform_3(%arg0: i32) -> (i32, i32) {
    %c0_i32 = arith.constant 0 : i32
    %c0_i32_0 = arith.constant 0 : i32
    %c0_i32_1 = arith.constant 0 : i32
    return %c0_i32, %c0_i32_0 : i32, i32
  }
  func.func @transform_4(%arg0: i32) -> (i32, i32) {
    %c0_i32 = arith.constant 0 : i32
    %c0_i32_0 = arith.constant 0 : i32
    %c0_i32_1 = arith.constant 0 : i32
    return %c0_i32, %c0_i32_0 : i32, i32
  }
  func.func @transform_5(%arg0: i32) -> (i32, i32) {
    %c0_i32 = arith.constant 0 : i32
    %c0_i32_0 = arith.constant 0 : i32
    %c0_i32_1 = arith.constant 0 : i32
    return %c0_i32, %c0_i32_0 : i32, i32
  }
  func.func @transform_6(%arg0: i32) -> (i32, i32) {
    %c0_i32 = arith.constant 0 : i32
    %c0_i32_0 = arith.constant 0 : i32
    %c0_i32_1 = arith.constant 0 : i32
    return %c0_i32, %c0_i32_0 : i32, i32
  }
  func.func @transform_7(%arg0: i32) -> (i32, i32) {
    %c0_i32 = arith.constant 0 : i32
    %c0_i32_0 = arith.constant 0 : i32
    %c0_i32_1 = arith.constant 0 : i32
    return %c0_i32, %c0_i32_0 : i32, i32
  }
  func.func @transform_8(%arg0: i32) -> (i32, i32) {
    %c0_i32 = arith.constant 0 : i32
    %c0_i32_0 = arith.constant 0 : i32
    return %arg0, %c0_i32 : i32, i32
  }
}

</mosaic_0001>

<llo_original>
// kernel: tpu_custom_call.1
$region0: #{tpu_custom_call.1}
  #allocation0 [shape = 'u32[]', space=smem, size = 0x4, offset = 0x4, fixed_abs, tag = 'smem constant byte address 0x4 - core index']
  #allocation1 [shape = 'u32[144,128]{1,0:T(1,128)}', space=vmem, size = 0x12000, scoped, tag = 'internal scratch']
  %s0 = inlined_call_operand.vmem [shape: f32[8,8], index: 0, kind: input, shape index: {}]
  %s1 = inlined_call_operand.vmem [shape: f32[8,4], index: 1, kind: input, shape index: {}]
  %s2 = inlined_call_operand.vmem [shape: bf16[8,32], index: 2, kind: input, shape index: {}]
  %s3 = inlined_call_operand.vmem [shape: f32[1,32], index: 3, kind: input, shape index: {}]
  %s4 = inlined_call_operand.vmem [shape: bf16[32,32], index: 4, kind: input, shape index: {}]
  %s5 = inlined_call_operand.vmem [shape: f32[1,32], index: 5, kind: input, shape index: {}]
  %s6 = inlined_call_operand.vmem [shape: bf16[32,8], index: 6, kind: input, shape index: {}]
  %s7 = inlined_call_operand.vmem [shape: f32[1,8], index: 7, kind: input, shape index: {}]
  %s8 = inlined_call_operand.hbm [shape: f32[8,128], index: 8, kind: output, shape index: {}]
  %s9 = sld [smem:[#allocation0]]
  $region42: #{tpu_custom_call.1} parent=0
    _
  %s11 = ssub.s32 1, %s9
  %s12 = scalar_select 0, %s11, %s9
  $region1: #{tpu_custom_call.1} parent=0
    #allocation2 [shape = 'u8[4096]{0}', space=vmem, size = 0x1000, scoped, tag = 'output window, operand 0, single buffered']
    #allocation3 [shape = 's32[1]{0}', space=sflag, size = 0x4, scoped, tag = 'scoped memory for tpu_custom_call.1']
    %13 = vsyncpa [#allocation3], 0
    // Predicated region
    $region2: #{tpu_custom_call.1} parent=1 // pred_check
      _
    $region3: #{tpu_custom_call.1} parent=1 // pred_check_branch
      %15 = sbr.rel (0) target = $region5
    $region4: #{tpu_custom_call.1} parent=1 // pred_region
      _
    $region5: #{tpu_custom_call.1} parent=1 // pred_fallthru
      _
    // Predicated region
    $region6: #{tpu_custom_call.1} parent=1 // pred_check
      _
    $region7: #{tpu_custom_call.1} parent=1 // pred_check_branch
      %17 = sbr.rel (0) target = $region9
    $region8: #{tpu_custom_call.1} parent=1 // pred_region
      _
    $region9: #{tpu_custom_call.1} parent=1 // pred_fallthru
      _
    // Predicated region
    $region10: #{tpu_custom_call.1} parent=1 // pred_check
      _
    $region11: #{tpu_custom_call.1} parent=1 // pred_check_branch
      %19 = sbr.rel (0) target = $region13
    $region12: #{tpu_custom_call.1} parent=1 // pred_region
      _
    $region13: #{tpu_custom_call.1} parent=1 // pred_fallthru
      _
    // Predicated region
    $region14: #{tpu_custom_call.1} parent=1 // pred_check
      _
    $region15: #{tpu_custom_call.1} parent=1 // pred_check_branch
      %21 = sbr.rel (0) target = $region17
    $region16: #{tpu_custom_call.1} parent=1 // pred_region
      _
    $region17: #{tpu_custom_call.1} parent=1 // pred_fallthru
      _
    // Predicated region
    $region18: #{tpu_custom_call.1} parent=1 // pred_check
      _
    $region19: #{tpu_custom_call.1} parent=1 // pred_check_branch
      %23 = sbr.rel (0) target = $region21
    $region20: #{tpu_custom_call.1} parent=1 // pred_region
      _
    $region21: #{tpu_custom_call.1} parent=1 // pred_fallthru
      _
    // Predicated region
    $region22: #{tpu_custom_call.1} parent=1 // pred_check
      _
    $region23: #{tpu_custom_call.1} parent=1 // pred_check_branch
      %25 = sbr.rel (0) target = $region25
    $region24: #{tpu_custom_call.1} parent=1 // pred_region
      _
    $region25: #{tpu_custom_call.1} parent=1 // pred_fallthru
      _
    // Predicated region
    $region26: #{tpu_custom_call.1} parent=1 // pred_check
      _
    $region27: #{tpu_custom_call.1} parent=1 // pred_check_branch
      %27 = sbr.rel (0) target = $region29
    $region28: #{tpu_custom_call.1} parent=1 // pred_region
      _
    $region29: #{tpu_custom_call.1} parent=1 // pred_fallthru
      _
    // Predicated region
    $region30: #{tpu_custom_call.1} parent=1 // pred_check
      _
    $region31: #{tpu_custom_call.1} parent=1 // pred_check_branch
      %29 = sbr.rel (0) target = $region33
    $region32: #{tpu_custom_call.1} parent=1 // pred_region
      _
    $region33: #{tpu_custom_call.1} parent=1 // pred_fallthru
      _
    %v31 = vld [vmem:[%s0] sm:$0xff]
    %v32 = vpack.c.bf16 %v31, %v31
    %v33 = vld [vmem:[%s2] sm:$0xf]
    %v34 = vld [vmem:[%s3] sm:$0x1]
    %v36 = vlaneseq
    %v37 = vshrl.u32 %v36, 7
    %v38 = vsub.s32 0, %v37
    %v39 = vrot.slane %v34, %v38
    %vm41 = vcmask 64512
    %v43 = vsel %vm41, %v32, 0
    %vm45 = vcmask 1043456
    %v47 = vsel %vm45, %v33, 0
    %49 = vmatprep.subr.bf16.mxu0 0
    %50 = vmatpush1.bf16.msra.mxu0 0
    %51 = vmatprep.subr.bf16.mxu0 0
    %52 = vmatpush1.bf16.msra.mxu0 0
    %53 = vmatprep.subr.bf16.mxu0 0
    %54 = vmatpush1.bf16.msra.mxu0 0
    %55 = vmatprep.subr.bf16.mxu0 0
    %56 = vmatpush1.bf16.msra.mxu0 0
    %57 = vmatprep.subr.bf16.mxu0 0
    %58 = vmatpush1.bf16.msra.mxu0 0
    %59 = vmatprep.subr.bf16.mxu0 0
    %60 = vmatpush1.bf16.msra.mxu0 0
    %61 = vmatprep.subr.bf16.mxu0 0
    %62 = vmatpush1.bf16.msra.mxu0 0
    %63 = vmatprep.subr.bf16.mxu0 0
    %64 = vmatpush1.bf16.msra.mxu0 %v47
    %65 = vmatprep.subr.bf16.mxu0 0
    %66 = vmatpush2.bf16.msra.mxu0 0
    %67 = vmatprep.subr.bf16.mxu0 0
    %68 = vmatpush2.bf16.msra.mxu0 0
    %69 = vmatprep.subr.bf16.mxu0 0
    %70 = vmatpush2.bf16.msra.mxu0 0
    %71 = vmatprep.subr.bf16.mxu0 0
    %72 = vmatpush2.bf16.msra.mxu0 0
    %73 = vmatprep.subr.bf16.mxu0 0
    %74 = vmatpush2.bf16.msra.mxu0 0
    %75 = vmatprep.subr.bf16.mxu0 0
    %76 = vmatpush2.bf16.msra.mxu0 0
    %77 = vmatprep.subr.bf16.mxu0 0
    %78 = vmatpush2.bf16.msra.mxu0 0
    %79 = vmatprep.subr.bf16.mxu0 0
    %80 = vmatpush2.bf16.msra.mxu0 0
    %81 = vmatprep.mubr.bf16.mxu0 0
    %82 = vmatmul.mubr.bf16.gmra.mxu0 %v43
    %v83 = vpop.f32.mrf.mxu0
    %v84 = vadd.f32 %v39, %v83
    %v85 = vpop.f32.mrf.mxu0
    %v86 = vpop.f32.mrf.mxu0
    %v87 = vpop.f32.mrf.mxu0
    %88 = vdwg.mxu0
    %v89 = vmax.f32 %v84, 0.0
    %v90 = vpack.c.bf16 %v89, %v89
    %v91 = vld [vmem:[%s4] sm:$0xf]
    %v92 = vld [vmem:[%s4 + $0x4] sm:$0xf]
    %v93 = vld [vmem:[%s4 + $0x8] sm:$0xf]
    %v94 = vld [vmem:[%s4 + $0xc] sm:$0xf]
    %v95 = vld [vmem:[%s5] sm:$0x1]
    %v97 = vlaneseq
    %v98 = vshrl.u32 %v97, 7
    %v99 = vsub.s32 0, %v98
    %v100 = vrot.slane %v95, %v99
    %v106 = vunpack.c.l.b16 %v91
    %v107 = vunpack.c.l.b16 %v92
    %v108 = vunpack.c.l.b16 %v93
    %v109 = vunpack.c.l.b16 %v94
    %v110 = vpack.c.b16 %v107, %v106
    %v111 = vpack.c.b16 %v109, %v108
    %vm114 = vcmask 261120
    %v116 = vsel %vm114, %v90, 0
    %118 = vmatprep.subr.bf16.mxu0 0
    %119 = vmatpush1.bf16.msra.mxu0 0
    %120 = vmatprep.subr.bf16.mxu0 0
    %121 = vmatpush1.bf16.msra.mxu0 0
    %122 = vmatprep.subr.bf16.mxu0 0
    %123 = vmatpush1.bf16.msra.mxu0 0
    %124 = vmatprep.subr.bf16.mxu0 0
    %125 = vmatpush1.bf16.msra.mxu0 0
    %126 = vmatprep.subr.bf16.mxu0 0
    %127 = vmatpush1.bf16.msra.mxu0 0
    %128 = vmatprep.subr.bf16.mxu0 0
    %129 = vmatpush1.bf16.msra.mxu0 0
    %130 = vmatprep.subr.bf16.mxu0 0
    %131 = vmatpush1.bf16.msra.mxu0 %v111
    %132 = vmatprep.subr.bf16.mxu0 0
    %133 = vmatpush1.bf16.msra.mxu0 %v110
    %134 = vmatprep.subr.bf16.mxu0 0
    %135 = vmatpush2.bf16.msra.mxu0 0
    %136 = vmatprep.subr.bf16.mxu0 0
    %137 = vmatpush2.bf16.msra.mxu0 0
    %138 = vmatprep.subr.bf16.mxu0 0
    %139 = vmatpush2.bf16.msra.mxu0 0
    %140 = vmatprep.subr.bf16.mxu0 0
    %141 = vmatpush2.bf16.msra.mxu0 0
    %142 = vmatprep.subr.bf16.mxu0 0
    %143 = vmatpush2.bf16.msra.mxu0 0
    %144 = vmatprep.subr.bf16.mxu0 0
    %145 = vmatpush2.bf16.msra.mxu0 0
    %146 = vmatprep.subr.bf16.mxu0 0
    %147 = vmatpush2.bf16.msra.mxu0 0
    %148 = vmatprep.subr.bf16.mxu0 0
    %149 = vmatpush2.bf16.msra.mxu0 0
    %150 = vmatprep.mubr.bf16.mxu0 0
    %151 = vmatmul.mubr.bf16.gmra.mxu0 %v116
    %v152 = vpop.f32.mrf.mxu0
    %v153 = vadd.f32 %v100, %v152
    %v154 = vpop.f32.mrf.mxu0
    %v155 = vpop.f32.mrf.mxu0
    %v156 = vpop.f32.mrf.mxu0
    %157 = vdwg.mxu0
    %v158 = vmax.f32 %v153, 0.0
    %v159 = vpack.c.bf16 %v158, %v158
    %v160 = vld [vmem:[%s6] sm:$0xf]
    %v161 = vld [vmem:[%s6 + $0x4] sm:$0xf]
    %v162 = vld [vmem:[%s6 + $0x8] sm:$0xf]
    %v163 = vld [vmem:[%s6 + $0xc] sm:$0xf]
    %v164 = vld [vmem:[%s7] sm:$0x1]
    %v166 = vlaneseq
    %v167 = vshrl.u32 %v166, 7
    %v168 = vsub.s32 0, %v167
    %v169 = vrot.slane %v164, %v168
    %v175 = vunpack.c.l.b16 %v160
    %v176 = vunpack.c.l.b16 %v161
    %v177 = vunpack.c.l.b16 %v162
    %v178 = vunpack.c.l.b16 %v163
    %v179 = vpack.c.b16 %v176, %v175
    %v180 = vpack.c.b16 %v178, %v177
    %v184 = vsel %vm114, %v159, 0
    %186 = vmatprep.subr.bf16.mxu0 0
    %187 = vmatpush1.bf16.msra.mxu0 0
    %188 = vmatprep.subr.bf16.mxu0 0
    %189 = vmatpush1.bf16.msra.mxu0 0
    %190 = vmatprep.subr.bf16.mxu0 0
    %191 = vmatpush1.bf16.msra.mxu0 0
    %192 = vmatprep.subr.bf16.mxu0 0
    %193 = vmatpush1.bf16.msra.mxu0 0
    %194 = vmatprep.subr.bf16.mxu0 0
    %195 = vmatpush1.bf16.msra.mxu0 0
    %196 = vmatprep.subr.bf16.mxu0 0
    %197 = vmatpush1.bf16.msra.mxu0 0
    %198 = vmatprep.subr.bf16.mxu0 0
    %199 = vmatpush1.bf16.msra.mxu0 %v180
    %200 = vmatprep.subr.bf16.mxu0 0
    %201 = vmatpush1.bf16.msra.mxu0 %v179
    %202 = vmatprep.subr.bf16.mxu0 0
    %203 = vmatpush2.bf16.msra.mxu0 0
    %204 = vmatprep.subr.bf16.mxu0 0
    %205 = vmatpush2.bf16.msra.mxu0 0
    %206 = vmatprep.subr.bf16.mxu0 0
    %207 = vmatpush2.bf16.msra.mxu0 0
    %208 = vmatprep.subr.bf16.mxu0 0
    %209 = vmatpush2.bf16.msra.mxu0 0
    %210 = vmatprep.subr.bf16.mxu0 0
    %211 = vmatpush2.bf16.msra.mxu0 0
    %212 = vmatprep.subr.bf16.mxu0 0
    %213 = vmatpush2.bf16.msra.mxu0 0
    %214 = vmatprep.subr.bf16.mxu0 0
    %215 = vmatpush2.bf16.msra.mxu0 0
    %216 = vmatprep.subr.bf16.mxu0 0
    %217 = vmatpush2.bf16.msra.mxu0 0
    %218 = vmatprep.mubr.bf16.mxu0 0
    %219 = vmatmul.mubr.bf16.gmra.mxu0 %v184
    %v220 = vpop.f32.mrf.mxu0
    %v221 = vadd.f32 %v169, %v220
    %v222 = vpop.f32.mrf.mxu0
    %v223 = vpop.f32.mrf.mxu0
    %v224 = vpop.f32.mrf.mxu0
    %225 = vdwg.mxu0
    %v226 = vmax.f32 %v221, -20.0
    %v227 = vmin.f32 %v226, 2.0
    %v228 = vmul.f32 %v227, 1.442695
    %v229 = vpow.pop %v228
    %v230 = vld [vmem:[%s1] sm:$0xff]
    %232 = vrot.lane.b32.xlu0 %v230, 4
    %v233 = vpop.permute.xlu0 %232
    %v235 = vmul.f32 %v229, %v233
    %237 = vrot.lane.b32.xlu0 %v235, 124
    %v238 = vpop.permute.xlu0 %237
    %v240 = vadd.f32 %v221, %v238
    %v241 = vtanh.pop %v240
    %v242 = vadd.f32 %v241, 0.0
    %v243 = vmul.f32 %v230, -0.5
    %v244 = vmul.f32 %v243, %v230
    %246 = vrot.lane.b32.xlu0 %v227, 124
    %v247 = vpop.permute.xlu0 %246
    %v249 = vsub.f32 %v244, %v247
    %v250 = vsub.f32 %v249, 0.9189385
    %v251 = vmul.f32 %v240, -2.0
    %v252 = vmax.f32 %v251, 0.0
    %v253 = vand.u32 2147483647, %v251
    %v254 = vsub.f32 0.0, %v253
    %v255 = vmul.f32 %v254, 1.442695
    %v256 = vpow.pop %v255
    %v257 = vadd.f32 %v256, 1.0
    %v258 = vlog2.pop %v257
    %v259 = vmul.f32 %v258, 0.6931472
    %v260 = vadd.f32 %v252, %v259
    %v261 = vsub.f32 0.6931472, %v240
    %v262 = vsub.f32 %v261, %v260
    %v263 = vmul.f32 %v262, 2.0
    %v264 = vadd.f32 %v263, 0.0
    %v265 = vsub.f32 %v250, %v264
    %vm266 = vcmask 31744
    %v267 = vsel %vm266, %v265, 0.0
    %268 = vadd.xlane.f32.xlu0 %v267
    %v269 = vpop.xlane.xlu0 %268
    %270 = vst [vmem:[#allocation2] sm:$0xff] 0.0
    %271 = vst.msk [vmem:[#allocation2] sm:$0xff] %vm266, %v242
    %vm272 = vcmask 39968
    %273 = vst.msk [vmem:[#allocation2] sm:$0xff] %vm272, %v269
    // Predicated region
    $region34: #{tpu_custom_call.1} parent=1 // pred_check
      _
    $region35: #{tpu_custom_call.1} parent=1 // pred_check_branch
      %275 = sbr.rel (0) target = $region37
    $region36: #{tpu_custom_call.1} parent=1 // pred_region
      %s277 = ssub.s32 128, 128
      %278 = vsyncadd [#allocation3], %s277
      %s280 = sshll.u32 [#allocation2], 4
      %s281 = int_to_ptr.vmem [resolvable:$true] %s280
      %283 = dma.vmem_to_hbm [thread:$0]  %s281, 128, %s8, [#allocation3]
    $region37: #{tpu_custom_call.1} parent=1 // pred_fallthru
      _
    // Predicated region
    $region38: #{tpu_custom_call.1} parent=1 // pred_check
      _
    $region39: #{tpu_custom_call.1} parent=1 // pred_check_branch
      %285 = sbr.rel (0) target = $region41
    $region40: #{tpu_custom_call.1} parent=1 // pred_region
      %286 = dma.done [#allocation3], 128
    $region41: #{tpu_custom_call.1} parent=1 // pred_fallthru
      _
    %287 = vsyncpa [#allocation3], 1

</llo_original>
